<compile_context>
chip_gen: v7x
topology: tpu7x:2x2x1
jax: 0.10.0
libtpu: 0.0.40
codegen_flags: <defaults>
</compile_context>

<pallas_src>
import functools

import jax
import jax.numpy as jnp
from jax.experimental import pallas as pl
from jax.experimental.pallas import tpu as pltpu


def _smu_kernel(beta_ref, x_ref, o_ref, *, alpha):
    # beta_ref: (1,) SMEM scalar parameter; x_ref/o_ref: (tile_rows, cols) VMEM tiles.
    x = x_ref[...]
    beta = beta_ref[0].astype(jnp.float32)

    # Scalars hoisted once per invocation.
    c = beta * jnp.float32(1.0 - alpha)          # erf argument scale
    k0 = 0.5 * (1.0 + alpha)                     # python floats -> weak-typed
    k1 = 0.5 * (1.0 - alpha)

    if x.dtype == jnp.bfloat16:
        # erf argument + erf in f32 (accuracy: beta ~ 100 amplifies x), outer
        # ops in bf16 (native bf16 VALU on v6e/v7x -> 2x elems per vreg).
        erf_v = jax.lax.erf(c * x.astype(jnp.float32)).astype(jnp.bfloat16)
        o_ref[...] = x * (k0 + k1 * erf_v)
    else:
        xf = x.astype(jnp.float32)               # f32 compute, cast on store
        y = xf * (k0 + k1 * jax.lax.erf(c * xf))
        o_ref[...] = y.astype(o_ref.dtype)


def _smu_jnp(x, beta, alpha):
    # Plain-jnp path for the tiny ragged tail (< 128 elements).
    b = beta[0].astype(jnp.float32)
    c = b * jnp.float32(1.0 - alpha)
    xf = x.astype(jnp.float32)
    y = xf * (0.5 * (1.0 + alpha) + 0.5 * (1.0 - alpha) * jax.lax.erf(c * xf))
    return y.astype(x.dtype)


def _smu_2d(x2d, beta, alpha):
    """Run the Pallas kernel on a lane-dense (rows, cols) slab, cols % 128 == 0."""
    rows, cols = x2d.shape
    dtype = x2d.dtype
    itemsize = jnp.dtype(dtype).itemsize
    n = rows * cols

    # Dtype-aware sublane alignment: f32 -> 8, bf16 -> 16, int8/fp8 -> 32.
    align = 8 * max(1, 4 // itemsize)

    # ~4 MiB tiles: amortize the ~0.35 us per-grid-step overhead; double-buffered
    # in+out = 16 MiB, fits the 32 MiB scoped VMEM limit set below.
    target_tile_bytes = 4 * 1024 * 1024
    tile_rows = max(align, target_tile_bytes // (cols * itemsize))
    tile_rows = (tile_rows // align) * align

    # v7x megacore: keep >=2 (ideally >=4) grid steps when the tensor is big
    # enough so the "parallel" axis can be sharded across both TensorCores.
    if rows > align:
        min_steps = 4 if rows >= 4 * align else 2
        cap = ((pl.cdiv(rows, min_steps) + align - 1) // align) * align
        tile_rows = min(tile_rows, cap)

    if tile_rows >= rows:
        tile_rows = rows                          # full dim -> always legal

    grid = (pl.cdiv(rows, tile_rows),)            # partial last block is masked

    cost = pl.CostEstimate(
        flops=5 * n,
        transcendentals=n,
        bytes_accessed=2 * n * itemsize,
    )

    return pl.pallas_call(
        functools.partial(_smu_kernel, alpha=float(alpha)),
        out_shape=jax.ShapeDtypeStruct((rows, cols), dtype),
        grid_spec=pltpu.PrefetchScalarGridSpec(
            num_scalar_prefetch=0,
            grid=grid,
            in_specs=[
                pl.BlockSpec(memory_space=pltpu.SMEM),              # beta (1,)
                pl.BlockSpec((tile_rows, cols), lambda i: (i, 0)),  # x tile
            ],
            out_specs=pl.BlockSpec((tile_rows, cols), lambda i: (i, 0)),
        ),
        compiler_params=pltpu.CompilerParams(
            dimension_semantics=("parallel",),
            vmem_limit_bytes=32 * 1024 * 1024,
        ),
        cost_estimate=cost,
    )(beta, x2d)


def smu_pallas(x, beta, alpha=0.01):
    """Elementwise SMU activation via a Pallas TPU kernel.

    x:    arbitrary-shape float array (e.g. NCHW).
    beta: shape-(1,) learnable scalar parameter.
    """
    orig_shape = x.shape
    n = x.size
    x_flat = jnp.ravel(x)

    # Prefer a large column count that divides x.size exactly -> zero copies.
    cols = None
    for c in (1024, 512, 256, 128):
        if n % c == 0:
            cols = c
            break

    if cols is not None:
        out2d = _smu_2d(x_flat.reshape(n // cols, cols), beta, alpha)
        return out2d.reshape(orig_shape)

    # Ragged total size: main kernel on the leading multiple-of-128 chunk
    # (contiguous, no pad copy); the < 128-element tail is done in plain jnp.
    cols = 128
    m = (n // cols) * cols
    tail_out = _smu_jnp(x_flat[m:], beta, alpha)
    if m == 0:
        return tail_out.reshape(orig_shape)
    main_out = _smu_2d(x_flat[:m].reshape(m // cols, cols), beta, alpha)
    out_flat = jnp.concatenate([main_out.reshape(-1), tail_out])
    return out_flat.reshape(orig_shape)


def smu_reference(x, beta, alpha=0.01):
    b = beta[0]
    return 0.5 * (
        (1.0 + alpha) * x + (1.0 - alpha) * x * jax.lax.erf(b * (1.0 - alpha) * x)
    )


if __name__ == "__main__":
    key = jax.random.PRNGKey(0)
    alpha = 0.01
    # Deterministic parameter init matching SMU.__init__ defaults: beta = 100.0
    beta = jnp.full((1,), 100.0, dtype=jnp.float32)

    # NCHW input consistent with typical conv-net usage of SMU.
    x = jax.random.normal(key, (2, 4, 16, 16), dtype=jnp.float32)
    out = jax.block_until_ready(smu_pallas(x, beta, alpha))
    ref = smu_reference(x, beta, alpha)
    assert out.shape == x.shape and out.dtype == x.dtype
    assert jnp.allclose(out, ref, atol=1e-5, rtol=1e-5)

    # Ragged total size: exercises the no-pad tail path.
    xr = jax.random.normal(jax.random.PRNGKey(1), (7, 33, 5), dtype=jnp.float32)
    outr = jax.block_until_ready(smu_pallas(xr, beta, alpha))
    refr = smu_reference(xr, beta, alpha)
    assert outr.shape == xr.shape and outr.dtype == xr.dtype
    assert jnp.allclose(outr, refr, atol=1e-5, rtol=1e-5)

    # bf16: exercises the mixed-precision (bf16 outer ops, f32 erf) path.
    xb = jax.random.normal(jax.random.PRNGKey(2), (2, 4, 16, 16), dtype=jnp.bfloat16)
    outb = jax.block_until_ready(smu_pallas(xb, beta, alpha))
    refb = smu_reference(xb.astype(jnp.float32), beta, alpha)
    assert outb.shape == xb.shape and outb.dtype == xb.dtype
    assert jnp.allclose(outb.astype(jnp.float32), refb, atol=5e-2, rtol=5e-2)

    print("KERNEL_OK")
</pallas_src>

<mosaic_0001>
module attributes {stable_mosaic.version = 11 : i64} {
  func.func @_smu_kernel(%arg0: i32, %arg1: memref<1xf32, #tpu.memory_space<smem>>, %arg2: memref<2x1024xf32, #tpu.memory_space<vmem>>, %arg3: memref<2x1024xf32, #tpu.memory_space<vmem>>) attributes {dimension_semantics = [#tpu.dimension_semantics<parallel>], iteration_bounds = array<i64: 1>, scalar_prefetch = 0 : i64, scratch_operands = 0 : i64, tpu.core_type = #tpu.core_type<tc>, window_params = [{transform_indices = @transform_0, window_bounds = array<i64: 1>}, {transform_indices = @transform_1, window_bounds = array<i64: 2, 1024>}, {transform_indices = @transform_2, window_bounds = array<i64: 2, 1024>}]} {
    %c0 = arith.constant 0 : index
    %c0_0 = arith.constant 0 : index
    %0 = vector.load %arg2[%c0, %c0_0] : memref<2x1024xf32, #tpu.memory_space<vmem>>, vector<2x1024xf32>
    %c0_1 = arith.constant 0 : index
    %1 = memref.load %arg1[%c0_1] : memref<1xf32, #tpu.memory_space<smem>>
    %cst = arith.constant 9.900000e-01 : f32
    %2 = arith.mulf %1, %cst : f32
    %3 = vector.broadcast %2 : f32 to vector<2x1024xf32>
    %4 = arith.mulf %3, %0 : vector<2x1024xf32>
    %5 = math.erf %4 : vector<2x1024xf32>
    %cst_2 = arith.constant 4.950000e-01 : f32
    %6 = vector.broadcast %cst_2 : f32 to vector<2x1024xf32>
    %7 = arith.mulf %6, %5 : vector<2x1024xf32>
    %cst_3 = arith.constant 5.050000e-01 : f32
    %8 = vector.broadcast %cst_3 : f32 to vector<2x1024xf32>
    %9 = arith.addf %8, %7 : vector<2x1024xf32>
    %10 = arith.mulf %0, %9 : vector<2x1024xf32>
    %c0_4 = arith.constant 0 : index
    %c0_5 = arith.constant 0 : index
    %11 = vector.load %arg3[%c0_4, %c0_5] : memref<2x1024xf32, #tpu.memory_space<vmem>>, vector<2x1024xf32>
    tpu.vector_store %arg3[%c0_4, %c0_5], %10 {strides = array<i32>} : memref<2x1024xf32, #tpu.memory_space<vmem>>, vector<2x1024xf32>,
    return
  }
  func.func @transform_0(%arg0: i32) -> i32 {
    %c0_i32 = arith.constant 0 : i32
    %c0_i32_0 = arith.constant 0 : i32
    return %c0_i32 : i32
  }
  func.func @transform_1(%arg0: i32) -> (i32, i32) {
    %c0_i32 = arith.constant 0 : i32
    %c0_i32_0 = arith.constant 0 : i32
    return %arg0, %c0_i32 : i32, i32
  }
  func.func @transform_2(%arg0: i32) -> (i32, i32) {
    %c0_i32 = arith.constant 0 : i32
    %c0_i32_0 = arith.constant 0 : i32
    return %arg0, %c0_i32 : i32, i32
  }
}

</mosaic_0001>

<llo_original>
// kernel: tpu_custom_call.1
$region0: #{tpu_custom_call.1}
  #allocation0 [shape = 'u32[]', space=smem, size = 0x4, offset = 0x4, fixed_abs, tag = 'smem constant byte address 0x4 - core index']
  #allocation1 [shape = 'u32[144,128]{1,0:T(1,128)}', space=vmem, size = 0x12000, scoped, tag = 'internal scratch']
  #allocation2 [shape = 'f32[1]{0:T(128)S(6)}', space=smem, size = 0x200, scoped, tag = 'scoped memory for tpu_custom_call.1']
  %s0 = inlined_call_operand.<no memory space> [shape: f32[1], index: 0, kind: input, shape index: {}]
  %s1 = inlined_call_operand.hbm [shape: f32[2,1024], index: 1, kind: input, shape index: {}]
  %s2 = inlined_call_operand.hbm [shape: f32[2,1024], index: 2, kind: output, shape index: {}]
  %s3 = sld [smem:[#allocation0]]
  $region22: #{tpu_custom_call.1} parent=0
    _
  %s5 = ssub.s32 1, %s3
  %s6 = scalar_select 0, %s5, %s3
  %7 = sst [smem:[#allocation2]] %s0
  $region1: #{tpu_custom_call.1} parent=0
    #allocation3 [shape = 'u8[8192]{0}', space=vmem, size = 0x2000, scoped, tag = 'input window, operand 1, single buffered']
    #allocation4 [shape = 's32[1]{0}', space=sflag, size = 0x4, scoped, tag = 'scoped memory for tpu_custom_call.1']
    #allocation5 [shape = 's32[1]{0}', space=sflag, size = 0x4, scoped, tag = 'scoped memory for tpu_custom_call.1']
    #allocation6 [shape = 'u8[8192]{0}', space=vmem, size = 0x2000, scoped, tag = 'output window, operand 0, single buffered']
    %8 = vsyncpa [#allocation4], 0
    %9 = vsyncpa [#allocation5], 0
    // Predicated region
    $region2: #{tpu_custom_call.1} parent=1 // pred_check
      _
    $region3: #{tpu_custom_call.1} parent=1 // pred_check_branch
      %11 = sbr.rel (0) target = $region5
    $region4: #{tpu_custom_call.1} parent=1 // pred_region
      _
    $region5: #{tpu_custom_call.1} parent=1 // pred_fallthru
      _
    // Predicated region
    $region6: #{tpu_custom_call.1} parent=1 // pred_check
      _
    $region7: #{tpu_custom_call.1} parent=1 // pred_check_branch
      %13 = sbr.rel (0) target = $region9
    $region8: #{tpu_custom_call.1} parent=1 // pred_region
      %s15 = ssub.s32 256, 256
      %16 = vsyncadd [#allocation4], %s15
      %s18 = sshll.u32 [#allocation3], 4
      %s19 = int_to_ptr.vmem [resolvable:$true] %s18
      %21 = dma.hbm_to_vmem [thread:$0]  %s1, 256, %s19, [#allocation4]
    $region9: #{tpu_custom_call.1} parent=1 // pred_fallthru
      _
    // Predicated region
    $region10: #{tpu_custom_call.1} parent=1 // pred_check
      _
    $region11: #{tpu_custom_call.1} parent=1 // pred_check_branch
      %23 = sbr.rel (0) target = $region13
    $region12: #{tpu_custom_call.1} parent=1 // pred_region
      %24 = dma.done [#allocation4], 256
    $region13: #{tpu_custom_call.1} parent=1 // pred_fallthru
      _
    %v25 = vld [vmem:[#allocation3] sm:$0xff]
    %v26 = vld [vmem:[#allocation3 + $0x8] sm:$0xff]
    %s27 = sld [smem:[#allocation2]]
    %s28 = smul.f32 %s27, 0.99
    %v29 = vstv %s28
    %v30 = vmul.f32 %v29, %v25
    %v31 = vmul.f32 %v29, %v26
    %v32 = verf.f32.pop %v30
    %v33 = verf.f32.pop %v31
    %v34 = vmul.f32 %v32, 0.495
    %v35 = vmul.f32 %v33, 0.495
    %v36 = vadd.f32 %v34, 0.505
    %v37 = vadd.f32 %v35, 0.505
    %v38 = vmul.f32 %v25, %v36
    %v39 = vmul.f32 %v26, %v37
    %40 = vst [vmem:[#allocation6] sm:$0xff] %v38
    %41 = vst [vmem:[#allocation6 + $0x8] sm:$0xff] %v39
    // Predicated region
    $region14: #{tpu_custom_call.1} parent=1 // pred_check
      _
    $region15: #{tpu_custom_call.1} parent=1 // pred_check_branch
      %43 = sbr.rel (0) target = $region17
    $region16: #{tpu_custom_call.1} parent=1 // pred_region
      %s45 = ssub.s32 256, 256
      %46 = vsyncadd [#allocation5], %s45
      %s48 = sshll.u32 [#allocation6], 4
      %s49 = int_to_ptr.vmem [resolvable:$true] %s48
      %51 = dma.vmem_to_hbm [thread:$0]  %s49, 256, %s2, [#allocation5]
    $region17: #{tpu_custom_call.1} parent=1 // pred_fallthru
      _
    // Predicated region
    $region18: #{tpu_custom_call.1} parent=1 // pred_check
      _
    $region19: #{tpu_custom_call.1} parent=1 // pred_check_branch
      %53 = sbr.rel (0) target = $region21
    $region20: #{tpu_custom_call.1} parent=1 // pred_region
      %54 = dma.done [#allocation5], 256
    $region21: #{tpu_custom_call.1} parent=1 // pred_fallthru
      _
    %55 = vsyncpa [#allocation4], 1
    %56 = vsyncpa [#allocation5], 1

</llo_original>
